<compile_context>
chip_gen: v5e
topology: v5e:2x2
jax: 0.10.0
libtpu: 0.0.40
codegen_flags: <defaults>
</compile_context>

<pallas_src>
import jax
import jax.numpy as jnp
from jax.experimental import pallas as pl
from jax.experimental.pallas import tpu as pltpu


def _round_up(x, m):
    return ((x + m - 1) // m) * m


def _fusion_kernel(rgb_ref, emg_ref, w1_ref, b1_ref, w2e_ref, w2r_ref, b2_ref,
                   out_ref):
    # Activations arrive as f32 tiles; cast to bf16 right before the MXU dots
    # (f32 accumulation via preferred_element_type).  Bias add + ReLU stay f32.
    rgb = rgb_ref[...].astype(jnp.bfloat16)           # (TB, 512)
    emg = emg_ref[...].astype(jnp.bfloat16)           # (TB, 50)

    # fc1 + ReLU: (TB,512)bf16 @ (512,50)bf16 -> f32.
    h = jnp.dot(rgb, w1_ref[...],
                preferred_element_type=jnp.float32) + b1_ref[...]
    h = jnp.maximum(h, 0.0)

    # fc2 on the (implicitly concatenated) [emg | rgb] features:
    #   (TB,50)bf16 @ (50,20)bf16  +  (TB,50)bf16 @ (50,20)bf16  + bias.
    out = (jnp.dot(emg, w2e_ref[...], preferred_element_type=jnp.float32)
           + jnp.dot(h.astype(jnp.bfloat16), w2r_ref[...],
                     preferred_element_type=jnp.float32)
           + b2_ref[...])
    out_ref[...] = out.astype(out_ref.dtype)


def prepare_params(params):
    """One-time weight preprocessing (hoisted out of the per-call path)."""
    w1, b1, w2, b2 = params["w1"], params["b1"], params["w2"], params["b2"]
    return {
        "w1_t":  jnp.asarray(w1.T, jnp.bfloat16),           # (512, 50)
        "w2e_t": jnp.asarray(w2[:, :50].T, jnp.bfloat16),    # (50, 20) emg half
        "w2r_t": jnp.asarray(w2[:, 50:].T, jnp.bfloat16),    # (50, 20) rgb half
        "b1":    jnp.asarray(b1.reshape(1, 50), jnp.float32),
        "b2":    jnp.asarray(b2.reshape(1, 20), jnp.float32),
    }


def _pick_batch_tile(B, batch_tile):
    """Tile rows: multiple of 8 (f32 sublane), >= ~512 when possible, and small
    enough that the grid has >= 4 steps for large B (pipelining + v7x megacore).
    Falls back to a single full-extent block for tiny batches."""
    pb8 = _round_up(B, 8)
    tb = max(512, _round_up(pl.cdiv(B, 4), 8))
    tb = min(tb, batch_tile, pb8)
    if tb >= B:
        tb = B          # one block covering the whole (possibly non-8-aligned) batch
    return tb


def fully_connected_fusion(feature_rgb, feature_emg, prepared, *, batch_tile=1024):
    """feature_rgb: (B, 1, 512) f32, feature_emg: (B, 5, 10) f32 -> (B, 20) f32."""
    B = feature_rgb.shape[0]

    # Glue (plain JAX, shape-only): squeeze / flatten.  No cast, no pad.
    rgb2d = feature_rgb.reshape(B, 512)
    emg2d = feature_emg.reshape(B, -1)
    assert emg2d.shape[1] == 50, "emg must flatten to 50 features"

    tb = _pick_batch_tile(B, batch_tile)
    grid = (pl.cdiv(B, tb),)     # ragged last tile handled by Pallas (no padding)

    batch_spec = lambda feat: pl.BlockSpec((tb, feat), lambda i: (i, 0))
    resident = lambda shape: pl.BlockSpec(shape, lambda i: (0, 0))

    out = pl.pallas_call(
        _fusion_kernel,
        out_shape=jax.ShapeDtypeStruct((B, 20), jnp.float32),
        grid=grid,
        in_specs=[
            batch_spec(512),      # rgb tile (streamed, double-buffered)
            batch_spec(50),       # emg tile (streamed, double-buffered)
            resident((512, 50)),  # w1^T      (resident across grid steps)
            resident((1, 50)),    # b1
            resident((50, 20)),   # w2 emg-half ^T
            resident((50, 20)),   # w2 rgb-half ^T
            resident((1, 20)),    # b2
        ],
        out_specs=batch_spec(20),
        compiler_params=pltpu.CompilerParams(
            dimension_semantics=("parallel",)),
    )(rgb2d, emg2d, prepared["w1_t"], prepared["b1"],
      prepared["w2e_t"], prepared["w2r_t"], prepared["b2"])

    return out, {}


def init_params(key):
    """Deterministic init matching nn.Linear shapes: fc1 (50,512), fc2 (20,100)."""
    k1, k2, k3, k4 = jax.random.split(key, 4)
    lim1 = 1.0 / (512.0 ** 0.5)
    lim2 = 1.0 / (100.0 ** 0.5)
    return {
        "w1": jax.random.uniform(k1, (50, 512), jnp.float32, -lim1, lim1),
        "b1": jax.random.uniform(k2, (50,), jnp.float32, -lim1, lim1),
        "w2": jax.random.uniform(k3, (20, 100), jnp.float32, -lim2, lim2),
        "b2": jax.random.uniform(k4, (20,), jnp.float32, -lim2, lim2),
    }


if __name__ == "__main__":
    key = jax.random.PRNGKey(0)
    kp, kr, ke = jax.random.split(key, 3)

    B = 4
    params = init_params(kp)
    prepared = prepare_params(params)
    feature_rgb = jax.random.normal(kr, (B, 1, 512), jnp.float32)
    feature_emg = jax.random.normal(ke, (B, 5, 10), jnp.float32)

    results, extra = fully_connected_fusion(feature_rgb, feature_emg, prepared)
    results = jax.block_until_ready(results)

    # Pure-JAX f32 reference of the same math (dropout = identity in eval).
    # Kernel runs the matmuls with bf16 inputs (f32 accumulation), so compare
    # at a bf16-appropriate tolerance.
    ref_h = jnp.maximum(
        feature_rgb.reshape(B, 512) @ params["w1"].T + params["b1"], 0.0)
    ref_comb = jnp.concatenate([feature_emg.reshape(B, -1), ref_h], axis=1)
    ref = ref_comb @ params["w2"].T + params["b2"]
    assert results.shape == (B, 20)
    assert jnp.allclose(results, ref, atol=2e-2, rtol=2e-2), \
        float(jnp.max(jnp.abs(results - ref)))

    print("KERNEL_OK")
</pallas_src>

<mosaic_0001>
module attributes {stable_mosaic.version = 11 : i64} {
  func.func @_fusion_kernel(%arg0: i32, %arg1: memref<4x512xf32, #tpu.memory_space<vmem>>, %arg2: memref<4x50xf32, #tpu.memory_space<vmem>>, %arg3: memref<512x50xbf16, #tpu.memory_space<vmem>>, %arg4: memref<1x50xf32, #tpu.memory_space<vmem>>, %arg5: memref<50x20xbf16, #tpu.memory_space<vmem>>, %arg6: memref<50x20xbf16, #tpu.memory_space<vmem>>, %arg7: memref<1x20xf32, #tpu.memory_space<vmem>>, %arg8: memref<4x20xf32, #tpu.memory_space<vmem>>) attributes {dimension_semantics = [#tpu.dimension_semantics<parallel>], iteration_bounds = array<i64: 1>, scalar_prefetch = 0 : i64, scratch_operands = 0 : i64, tpu.core_type = #tpu.core_type<tc>, window_params = [{transform_indices = @transform_0, window_bounds = array<i64: 4, 512>}, {transform_indices = @transform_1, window_bounds = array<i64: 4, 50>}, {pipeline_mode = #tpu.pipeline_mode<synchronous>, transform_indices = @transform_2, window_bounds = array<i64: 512, 50>}, {pipeline_mode = #tpu.pipeline_mode<synchronous>, transform_indices = @transform_3, window_bounds = array<i64: 1, 50>}, {pipeline_mode = #tpu.pipeline_mode<synchronous>, transform_indices = @transform_4, window_bounds = array<i64: 50, 20>}, {pipeline_mode = #tpu.pipeline_mode<synchronous>, transform_indices = @transform_5, window_bounds = array<i64: 50, 20>}, {pipeline_mode = #tpu.pipeline_mode<synchronous>, transform_indices = @transform_6, window_bounds = array<i64: 1, 20>}, {transform_indices = @transform_7, window_bounds = array<i64: 4, 20>}]} {
    %c0 = arith.constant 0 : index
    %c0_0 = arith.constant 0 : index
    %0 = vector.load %arg1[%c0, %c0_0] : memref<4x512xf32, #tpu.memory_space<vmem>>, vector<4x512xf32>
    %1 = arith.truncf %0 : vector<4x512xf32> to vector<4x512xbf16>
    %c0_1 = arith.constant 0 : index
    %c0_2 = arith.constant 0 : index
    %2 = vector.load %arg2[%c0_1, %c0_2] : memref<4x50xf32, #tpu.memory_space<vmem>>, vector<4x50xf32>
    %3 = arith.truncf %2 : vector<4x50xf32> to vector<4x50xbf16>
    %c0_3 = arith.constant 0 : index
    %c0_4 = arith.constant 0 : index
    %4 = vector.load %arg3[%c0_3, %c0_4] : memref<512x50xbf16, #tpu.memory_space<vmem>>, vector<512x50xbf16>
    %cst = arith.constant dense<0.000000e+00> : vector<4x50xf32>
    %5 = tpu.matmul %1, %4, %cst {dimension_numbers = #tpu.dot_dimension_numbers<[1], [0], [0], [1], [0, 0, 1, 1], [], []>} : vector<4x512xbf16>, vector<512x50xbf16>, vector<4x50xf32> -> vector<4x50xf32>
    %c0_5 = arith.constant 0 : index
    %c0_6 = arith.constant 0 : index
    %6 = vector.load %arg4[%c0_5, %c0_6] : memref<1x50xf32, #tpu.memory_space<vmem>>, vector<1x50xf32>
    %7 = vector.broadcast %6 : vector<1x50xf32> to vector<4x50xf32>
    %8 = arith.addf %5, %7 : vector<4x50xf32>
    %cst_7 = arith.constant 0.000000e+00 : f32
    %9 = vector.broadcast %cst_7 : f32 to vector<4x50xf32>
    %10 = arith.maximumf %8, %9 : vector<4x50xf32>
    %c0_8 = arith.constant 0 : index
    %c0_9 = arith.constant 0 : index
    %11 = vector.load %arg5[%c0_8, %c0_9] : memref<50x20xbf16, #tpu.memory_space<vmem>>, vector<50x20xbf16>
    %cst_10 = arith.constant dense<0.000000e+00> : vector<4x20xf32>
    %12 = tpu.matmul %3, %11, %cst_10 {dimension_numbers = #tpu.dot_dimension_numbers<[1], [0], [0], [1], [0, 0, 1, 1], [], []>} : vector<4x50xbf16>, vector<50x20xbf16>, vector<4x20xf32> -> vector<4x20xf32>
    %13 = arith.truncf %10 : vector<4x50xf32> to vector<4x50xbf16>
    %c0_11 = arith.constant 0 : index
    %c0_12 = arith.constant 0 : index
    %14 = vector.load %arg6[%c0_11, %c0_12] : memref<50x20xbf16, #tpu.memory_space<vmem>>, vector<50x20xbf16>
    %cst_13 = arith.constant dense<0.000000e+00> : vector<4x20xf32>
    %15 = tpu.matmul %13, %14, %cst_13 {dimension_numbers = #tpu.dot_dimension_numbers<[1], [0], [0], [1], [0, 0, 1, 1], [], []>} : vector<4x50xbf16>, vector<50x20xbf16>, vector<4x20xf32> -> vector<4x20xf32>
    %16 = arith.addf %12, %15 : vector<4x20xf32>
    %c0_14 = arith.constant 0 : index
    %c0_15 = arith.constant 0 : index
    %17 = vector.load %arg7[%c0_14, %c0_15] : memref<1x20xf32, #tpu.memory_space<vmem>>, vector<1x20xf32>
    %18 = vector.broadcast %17 : vector<1x20xf32> to vector<4x20xf32>
    %19 = arith.addf %16, %18 : vector<4x20xf32>
    %c0_16 = arith.constant 0 : index
    %c0_17 = arith.constant 0 : index
    %20 = vector.load %arg8[%c0_16, %c0_17] : memref<4x20xf32, #tpu.memory_space<vmem>>, vector<4x20xf32>
    tpu.vector_store %arg8[%c0_16, %c0_17], %19 {strides = array<i32>} : memref<4x20xf32, #tpu.memory_space<vmem>>, vector<4x20xf32>,
    return
  }
  func.func @transform_0(%arg0: i32) -> (i32, i32) {
    %c0_i32 = arith.constant 0 : i32
    %c0_i32_0 = arith.constant 0 : i32
    return %arg0, %c0_i32 : i32, i32
  }
  func.func @transform_1(%arg0: i32) -> (i32, i32) {
    %c0_i32 = arith.constant 0 : i32
    %c0_i32_0 = arith.constant 0 : i32
    return %arg0, %c0_i32 : i32, i32
  }
  func.func @transform_2(%arg0: i32) -> (i32, i32) {
    %c0_i32 = arith.constant 0 : i32
    %c0_i32_0 = arith.constant 0 : i32
    %c0_i32_1 = arith.constant 0 : i32
    return %c0_i32, %c0_i32_0 : i32, i32
  }
  func.func @transform_3(%arg0: i32) -> (i32, i32) {
    %c0_i32 = arith.constant 0 : i32
    %c0_i32_0 = arith.constant 0 : i32
    %c0_i32_1 = arith.constant 0 : i32
    return %c0_i32, %c0_i32_0 : i32, i32
  }
  func.func @transform_4(%arg0: i32) -> (i32, i32) {
    %c0_i32 = arith.constant 0 : i32
    %c0_i32_0 = arith.constant 0 : i32
    %c0_i32_1 = arith.constant 0 : i32
    return %c0_i32, %c0_i32_0 : i32, i32
  }
  func.func @transform_5(%arg0: i32) -> (i32, i32) {
    %c0_i32 = arith.constant 0 : i32
    %c0_i32_0 = arith.constant 0 : i32
    %c0_i32_1 = arith.constant 0 : i32
    return %c0_i32, %c0_i32_0 : i32, i32
  }
  func.func @transform_6(%arg0: i32) -> (i32, i32) {
    %c0_i32 = arith.constant 0 : i32
    %c0_i32_0 = arith.constant 0 : i32
    %c0_i32_1 = arith.constant 0 : i32
    return %c0_i32, %c0_i32_0 : i32, i32
  }
  func.func @transform_7(%arg0: i32) -> (i32, i32) {
    %c0_i32 = arith.constant 0 : i32
    %c0_i32_0 = arith.constant 0 : i32
    return %arg0, %c0_i32 : i32, i32
  }
}

</mosaic_0001>

<llo_original>
// kernel: tpu_custom_call.1
$region0: #{tpu_custom_call.1}
  #allocation0 [shape = 'u32[]', space=smem, size = 0x4, offset = 0x4, fixed_abs, tag = 'smem constant byte address 0x4 - core index']
  #allocation1 [shape = 'u32[72,128]{1,0:T(1,128)}', space=vmem, size = 0x9000, scoped, tag = 'internal scratch']
  %s0 = inlined_call_operand.vmem [shape: f32[4,512], index: 0, kind: input, shape index: {}]
  %s1 = inlined_call_operand.vmem [shape: f32[4,50], index: 1, kind: input, shape index: {}]
  %s2 = inlined_call_operand.vmem [shape: bf16[512,50], index: 2, kind: input, shape index: {}]
  %s3 = inlined_call_operand.vmem [shape: f32[1,50], index: 3, kind: input, shape index: {}]
  %s4 = inlined_call_operand.vmem [shape: bf16[50,20], index: 4, kind: input, shape index: {}]
  %s5 = inlined_call_operand.vmem [shape: bf16[50,20], index: 5, kind: input, shape index: {}]
  %s6 = inlined_call_operand.vmem [shape: f32[1,20], index: 6, kind: input, shape index: {}]
  %s7 = inlined_call_operand.hbm [shape: f32[4,20], index: 7, kind: output, shape index: {}]
  %s8 = sld [smem:[#allocation0]]
  $region38: #{tpu_custom_call.1} parent=0
    _
  %s10 = ssub.s32 1, %s8
  %s11 = scalar_select 0, %s10, %s8
  $region1: #{tpu_custom_call.1} parent=0
    #allocation2 [shape = 'u8[2048]{0}', space=vmem, size = 0x800, scoped, tag = 'output window, operand 0, single buffered']
    #allocation3 [shape = 's32[1]{0}', space=sflag, size = 0x4, scoped, tag = 'scoped memory for tpu_custom_call.1']
    %12 = vsyncpa [#allocation3], 0
    // Predicated region
    $region2: #{tpu_custom_call.1} parent=1 // pred_check
      _
    $region3: #{tpu_custom_call.1} parent=1 // pred_check_branch
      %14 = sbr.rel (0) target = $region5
    $region4: #{tpu_custom_call.1} parent=1 // pred_region
      _
    $region5: #{tpu_custom_call.1} parent=1 // pred_fallthru
      _
    // Predicated region
    $region6: #{tpu_custom_call.1} parent=1 // pred_check
      _
    $region7: #{tpu_custom_call.1} parent=1 // pred_check_branch
      %16 = sbr.rel (0) target = $region9
    $region8: #{tpu_custom_call.1} parent=1 // pred_region
      _
    $region9: #{tpu_custom_call.1} parent=1 // pred_fallthru
      _
    // Predicated region
    $region10: #{tpu_custom_call.1} parent=1 // pred_check
      _
    $region11: #{tpu_custom_call.1} parent=1 // pred_check_branch
      %18 = sbr.rel (0) target = $region13
    $region12: #{tpu_custom_call.1} parent=1 // pred_region
      _
    $region13: #{tpu_custom_call.1} parent=1 // pred_fallthru
      _
    // Predicated region
    $region14: #{tpu_custom_call.1} parent=1 // pred_check
      _
    $region15: #{tpu_custom_call.1} parent=1 // pred_check_branch
      %20 = sbr.rel (0) target = $region17
    $region16: #{tpu_custom_call.1} parent=1 // pred_region
      _
    $region17: #{tpu_custom_call.1} parent=1 // pred_fallthru
      _
    // Predicated region
    $region18: #{tpu_custom_call.1} parent=1 // pred_check
      _
    $region19: #{tpu_custom_call.1} parent=1 // pred_check_branch
      %22 = sbr.rel (0) target = $region21
    $region20: #{tpu_custom_call.1} parent=1 // pred_region
      _
    $region21: #{tpu_custom_call.1} parent=1 // pred_fallthru
      _
    // Predicated region
    $region22: #{tpu_custom_call.1} parent=1 // pred_check
      _
    $region23: #{tpu_custom_call.1} parent=1 // pred_check_branch
      %24 = sbr.rel (0) target = $region25
    $region24: #{tpu_custom_call.1} parent=1 // pred_region
      _
    $region25: #{tpu_custom_call.1} parent=1 // pred_fallthru
      _
    // Predicated region
    $region26: #{tpu_custom_call.1} parent=1 // pred_check
      _
    $region27: #{tpu_custom_call.1} parent=1 // pred_check_branch
      %26 = sbr.rel (0) target = $region29
    $region28: #{tpu_custom_call.1} parent=1 // pred_region
      _
    $region29: #{tpu_custom_call.1} parent=1 // pred_fallthru
      _
    %v28 = vld [vmem:[%s0] sm:$0xff]
    %v29 = vld [vmem:[%s0 + $0x8] sm:$0xff]
    %32 = vst [vmem:[#allocation1] ss:$2 sm:$0xff] %v28
    %s33 = scalar_lea.vmem [#allocation1], 16
    %34 = vst [vmem:[%s33] ss:$2 sm:$0xff] %v29
    %v35 = vld.sshfl [vmem:[#allocation1] sm:$0xff pattern:$0x75316420]
    %v36 = vld.sshfl [vmem:[#allocation1 + $0x8] sm:$0xff pattern:$0x75316420]
    %v37 = vld.sshfl [vmem:[#allocation1 + $0x10] sm:$0xff pattern:$0x75316420]
    %v38 = vld.sshfl [vmem:[#allocation1 + $0x18] sm:$0xff pattern:$0x75316420]
    %v43 = vpack.c.bf16 %v35, %v35
    %v44 = vpack.c.bf16 %v36, %v36
    %v45 = vpack.c.bf16 %v37, %v37
    %v46 = vpack.c.bf16 %v38, %v38
    %v47 = vld [vmem:[%s1] sm:$0xf]
    %v48 = vpack.c.bf16 %v47, %v47
    %v49 = vld [vmem:[%s2] sm:$0xf]
    %v50 = vld [vmem:[%s2 + $0x4] sm:$0xf]
    %v51 = vld [vmem:[%s2 + $0x8] sm:$0xf]
    %v52 = vld [vmem:[%s2 + $0xc] sm:$0xf]
    %v53 = vld [vmem:[%s2 + $0x10] sm:$0xf]
    %v54 = vld [vmem:[%s2 + $0x14] sm:$0xf]
    %v55 = vld [vmem:[%s2 + $0x18] sm:$0xf]
    %v56 = vld [vmem:[%s2 + $0x1c] sm:$0xf]
    %v57 = vld [vmem:[%s2 + $0x20] sm:$0xf]
    %v58 = vld [vmem:[%s2 + $0x24] sm:$0xf]
    %v59 = vld [vmem:[%s2 + $0x28] sm:$0xf]
    %v60 = vld [vmem:[%s2 + $0x2c] sm:$0xf]
    %v61 = vld [vmem:[%s2 + $0x30] sm:$0xf]
    %v62 = vld [vmem:[%s2 + $0x34] sm:$0xf]
    %v63 = vld [vmem:[%s2 + $0x38] sm:$0xf]
    %v64 = vld [vmem:[%s2 + $0x3c] sm:$0xf]
    %v65 = vld [vmem:[%s2 + $0x40] sm:$0xf]
    %v66 = vld [vmem:[%s2 + $0x44] sm:$0xf]
    %v67 = vld [vmem:[%s2 + $0x48] sm:$0xf]
    %v68 = vld [vmem:[%s2 + $0x4c] sm:$0xf]
    %v69 = vld [vmem:[%s2 + $0x50] sm:$0xf]
    %v70 = vld [vmem:[%s2 + $0x54] sm:$0xf]
    %v71 = vld [vmem:[%s2 + $0x58] sm:$0xf]
    %v72 = vld [vmem:[%s2 + $0x5c] sm:$0xf]
    %v73 = vld [vmem:[%s2 + $0x60] sm:$0xf]
    %v74 = vld [vmem:[%s2 + $0x64] sm:$0xf]
    %v75 = vld [vmem:[%s2 + $0x68] sm:$0xf]
    %v76 = vld [vmem:[%s2 + $0x6c] sm:$0xf]
    %v77 = vld [vmem:[%s2 + $0x70] sm:$0xf]
    %v78 = vld [vmem:[%s2 + $0x74] sm:$0xf]
    %v79 = vld [vmem:[%s2 + $0x78] sm:$0xf]
    %v80 = vld [vmem:[%s2 + $0x7c] sm:$0xf]
    %v81 = vld [vmem:[%s2 + $0x80] sm:$0xf]
    %v82 = vld [vmem:[%s2 + $0x84] sm:$0xf]
    %v83 = vld [vmem:[%s2 + $0x88] sm:$0xf]
    %v84 = vld [vmem:[%s2 + $0x8c] sm:$0xf]
    %v85 = vld [vmem:[%s2 + $0x90] sm:$0xf]
    %v86 = vld [vmem:[%s2 + $0x94] sm:$0xf]
    %v87 = vld [vmem:[%s2 + $0x98] sm:$0xf]
    %v88 = vld [vmem:[%s2 + $0x9c] sm:$0xf]
    %v89 = vld [vmem:[%s2 + $0xa0] sm:$0xf]
    %v90 = vld [vmem:[%s2 + $0xa4] sm:$0xf]
    %v91 = vld [vmem:[%s2 + $0xa8] sm:$0xf]
    %v92 = vld [vmem:[%s2 + $0xac] sm:$0xf]
    %v93 = vld [vmem:[%s2 + $0xb0] sm:$0xf]
    %v94 = vld [vmem:[%s2 + $0xb4] sm:$0xf]
    %v95 = vld [vmem:[%s2 + $0xb8] sm:$0xf]
    %v96 = vld [vmem:[%s2 + $0xbc] sm:$0xf]
    %v97 = vld [vmem:[%s2 + $0xc0] sm:$0xf]
    %v98 = vld [vmem:[%s2 + $0xc4] sm:$0xf]
    %v99 = vld [vmem:[%s2 + $0xc8] sm:$0xf]
    %v100 = vld [vmem:[%s2 + $0xcc] sm:$0xf]
    %v101 = vld [vmem:[%s2 + $0xd0] sm:$0xf]
    %v102 = vld [vmem:[%s2 + $0xd4] sm:$0xf]
    %v103 = vld [vmem:[%s2 + $0xd8] sm:$0xf]
    %v104 = vld [vmem:[%s2 + $0xdc] sm:$0xf]
    %v105 = vld [vmem:[%s2 + $0xe0] sm:$0xf]
    %v106 = vld [vmem:[%s2 + $0xe4] sm:$0xf]
    %v107 = vld [vmem:[%s2 + $0xe8] sm:$0xf]
    %v108 = vld [vmem:[%s2 + $0xec] sm:$0xf]
    %v109 = vld [vmem:[%s2 + $0xf0] sm:$0xf]
    %v110 = vld [vmem:[%s2 + $0xf4] sm:$0xf]
    %v111 = vld [vmem:[%s2 + $0xf8] sm:$0xf]
    %v112 = vld [vmem:[%s2 + $0xfc] sm:$0xf]
    %v113 = vld [vmem:[%s3] sm:$0x1]
    %v115 = vperm.slane %v113, 0
    %v181 = vunpack.c.l.b16 %v49
    %v182 = vunpack.c.l.b16 %v50
    %v183 = vunpack.c.l.b16 %v51
    %v184 = vunpack.c.l.b16 %v52
    %v185 = vunpack.c.l.b16 %v53
    %v186 = vunpack.c.l.b16 %v54
    %v187 = vunpack.c.l.b16 %v55
    %v188 = vunpack.c.l.b16 %v56
    %v189 = vunpack.c.l.b16 %v57
    %v190 = vunpack.c.l.b16 %v58
    %v191 = vunpack.c.l.b16 %v59
    %v192 = vunpack.c.l.b16 %v60
    %v193 = vunpack.c.l.b16 %v61
    %v194 = vunpack.c.l.b16 %v62
    %v195 = vunpack.c.l.b16 %v63
    %v196 = vunpack.c.l.b16 %v64
    %v197 = vunpack.c.l.b16 %v65
    %v198 = vunpack.c.l.b16 %v66
    %v199 = vunpack.c.l.b16 %v67
    %v200 = vunpack.c.l.b16 %v68
    %v201 = vunpack.c.l.b16 %v69
    %v202 = vunpack.c.l.b16 %v70
    %v203 = vunpack.c.l.b16 %v71
    %v204 = vunpack.c.l.b16 %v72
    %v205 = vunpack.c.l.b16 %v73
    %v206 = vunpack.c.l.b16 %v74
    %v207 = vunpack.c.l.b16 %v75
    %v208 = vunpack.c.l.b16 %v76
    %v209 = vunpack.c.l.b16 %v77
    %v210 = vunpack.c.l.b16 %v78
    %v211 = vunpack.c.l.b16 %v79
    %v212 = vunpack.c.l.b16 %v80
    %v213 = vunpack.c.l.b16 %v81
    %v214 = vunpack.c.l.b16 %v82
    %v215 = vunpack.c.l.b16 %v83
    %v216 = vunpack.c.l.b16 %v84
    %v217 = vunpack.c.l.b16 %v85
    %v218 = vunpack.c.l.b16 %v86
    %v219 = vunpack.c.l.b16 %v87
    %v220 = vunpack.c.l.b16 %v88
    %v221 = vunpack.c.l.b16 %v89
    %v222 = vunpack.c.l.b16 %v90
    %v223 = vunpack.c.l.b16 %v91
    %v224 = vunpack.c.l.b16 %v92
    %v225 = vunpack.c.l.b16 %v93
    %v226 = vunpack.c.l.b16 %v94
    %v227 = vunpack.c.l.b16 %v95
    %v228 = vunpack.c.l.b16 %v96
    %v229 = vunpack.c.l.b16 %v97
    %v230 = vunpack.c.l.b16 %v98
    %v231 = vunpack.c.l.b16 %v99
    %v232 = vunpack.c.l.b16 %v100
    %v233 = vunpack.c.l.b16 %v101
    %v234 = vunpack.c.l.b16 %v102
    %v235 = vunpack.c.l.b16 %v103
    %v236 = vunpack.c.l.b16 %v104
    %v237 = vunpack.c.l.b16 %v105
    %v238 = vunpack.c.l.b16 %v106
    %v239 = vunpack.c.l.b16 %v107
    %v240 = vunpack.c.l.b16 %v108
    %v241 = vunpack.c.l.b16 %v109
    %v242 = vunpack.c.l.b16 %v110
    %v243 = vunpack.c.l.b16 %v111
    %v244 = vunpack.c.l.b16 %v112
    %v245 = vpack.c.b16 %v182, %v181
    %v246 = vpack.c.b16 %v184, %v183
    %v247 = vpack.c.b16 %v186, %v185
    %v248 = vpack.c.b16 %v188, %v187
    %v249 = vpack.c.b16 %v190, %v189
    %v250 = vpack.c.b16 %v192, %v191
    %v251 = vpack.c.b16 %v194, %v193
    %v252 = vpack.c.b16 %v196, %v195
    %v253 = vpack.c.b16 %v198, %v197
    %v254 = vpack.c.b16 %v200, %v199
    %v255 = vpack.c.b16 %v202, %v201
    %v256 = vpack.c.b16 %v204, %v203
    %v257 = vpack.c.b16 %v206, %v205
    %v258 = vpack.c.b16 %v208, %v207
    %v259 = vpack.c.b16 %v210, %v209
    %v260 = vpack.c.b16 %v212, %v211
    %v261 = vpack.c.b16 %v214, %v213
    %v262 = vpack.c.b16 %v216, %v215
    %v263 = vpack.c.b16 %v218, %v217
    %v264 = vpack.c.b16 %v220, %v219
    %v265 = vpack.c.b16 %v222, %v221
    %v266 = vpack.c.b16 %v224, %v223
    %v267 = vpack.c.b16 %v226, %v225
    %v268 = vpack.c.b16 %v228, %v227
    %v269 = vpack.c.b16 %v230, %v229
    %v270 = vpack.c.b16 %v232, %v231
    %v271 = vpack.c.b16 %v234, %v233
    %v272 = vpack.c.b16 %v236, %v235
    %v273 = vpack.c.b16 %v238, %v237
    %v274 = vpack.c.b16 %v240, %v239
    %v275 = vpack.c.b16 %v242, %v241
    %v276 = vpack.c.b16 %v244, %v243
    %309 = vmatpush.bf16.msra.mxu0 %v252
    %310 = vmatpush.bf16.msra.mxu0 %v251
    %311 = vmatpush.bf16.msra.mxu0 %v250
    %312 = vmatpush.bf16.msra.mxu0 %v249
    %313 = vmatpush.bf16.msra.mxu0 %v248
    %314 = vmatpush.bf16.msra.mxu0 %v247
    %315 = vmatpush.bf16.msra.mxu0 %v246
    %316 = vmatpush.bf16.msra.mxu0 %v245
    %317 = vmatmul.bf16.gmra.mxu0 %v43
    %v318 = vpop.f32.mrf.mxu0
    %v319 = vadd.f32 %v115, %v318
    %v320 = vpop.f32.mrf.mxu0
    %321 = vdwg.mxu0
    %322 = vmatpush.bf16.msra.mxu0 %v260
    %323 = vmatpush.bf16.msra.mxu0 %v259
    %324 = vmatpush.bf16.msra.mxu0 %v258
    %325 = vmatpush.bf16.msra.mxu0 %v257
    %326 = vmatpush.bf16.msra.mxu0 %v256
    %327 = vmatpush.bf16.msra.mxu0 %v255
    %328 = vmatpush.bf16.msra.mxu0 %v254
    %329 = vmatpush.bf16.msra.mxu0 %v253
    %330 = vmatmul.bf16.gmra.mxu0 %v44
    %v331 = vpop.f32.mrf.mxu0
    %v332 = vadd.f32 %v319, %v331
    %v333 = vpop.f32.mrf.mxu0
    %334 = vdwg.mxu0
    %335 = vmatpush.bf16.msra.mxu0 %v268
    %336 = vmatpush.bf16.msra.mxu0 %v267
    %337 = vmatpush.bf16.msra.mxu0 %v266
    %338 = vmatpush.bf16.msra.mxu0 %v265
    %339 = vmatpush.bf16.msra.mxu0 %v264
    %340 = vmatpush.bf16.msra.mxu0 %v263
    %341 = vmatpush.bf16.msra.mxu0 %v262
    %342 = vmatpush.bf16.msra.mxu0 %v261
    %343 = vmatmul.bf16.gmra.mxu0 %v45
    %v344 = vpop.f32.mrf.mxu0
    %v345 = vadd.f32 %v332, %v344
    %v346 = vpop.f32.mrf.mxu0
    %347 = vdwg.mxu0
    %348 = vmatpush.bf16.msra.mxu0 %v276
    %349 = vmatpush.bf16.msra.mxu0 %v275
    %350 = vmatpush.bf16.msra.mxu0 %v274
    %351 = vmatpush.bf16.msra.mxu0 %v273
    %352 = vmatpush.bf16.msra.mxu0 %v272
    %353 = vmatpush.bf16.msra.mxu0 %v271
    %354 = vmatpush.bf16.msra.mxu0 %v270
    %355 = vmatpush.bf16.msra.mxu0 %v269
    %356 = vmatmul.bf16.gmra.mxu0 %v46
    %v357 = vpop.f32.mrf.mxu0
    %v358 = vadd.f32 %v345, %v357
    %v359 = vpop.f32.mrf.mxu0
    %360 = vdwg.mxu0
    %v361 = vmax.f32 %v358, 0.0
    %v362 = vld [vmem:[%s4] sm:$0xf]
    %v363 = vld [vmem:[%s4 + $0x4] sm:$0xf]
    %v364 = vld [vmem:[%s4 + $0x8] sm:$0xf]
    %v365 = vld [vmem:[%s4 + $0xc] sm:$0xf]
    %v366 = vld [vmem:[%s4 + $0x10] sm:$0xf]
    %v367 = vld [vmem:[%s4 + $0x14] sm:$0xf]
    %v368 = vld [vmem:[%s4 + $0x18] sm:$0x1]
    %v369 = vpack.c.bf16 %v361, %v361
    %v370 = vld [vmem:[%s5] sm:$0xf]
    %v371 = vld [vmem:[%s5 + $0x4] sm:$0xf]
    %v372 = vld [vmem:[%s5 + $0x8] sm:$0xf]
    %v373 = vld [vmem:[%s5 + $0xc] sm:$0xf]
    %v374 = vld [vmem:[%s5 + $0x10] sm:$0xf]
    %v375 = vld [vmem:[%s5 + $0x14] sm:$0xf]
    %v376 = vld [vmem:[%s5 + $0x18] sm:$0x1]
    %v384 = vunpack.c.l.b16 %v370
    %v385 = vunpack.c.l.b16 %v371
    %v386 = vunpack.c.l.b16 %v372
    %v387 = vunpack.c.l.b16 %v373
    %v388 = vunpack.c.l.b16 %v374
    %v389 = vunpack.c.l.b16 %v375
    %v390 = vunpack.c.l.b16 %v376
    %v391 = vpack.c.b16 %v385, %v384
    %v392 = vpack.c.b16 %v387, %v386
    %v393 = vpack.c.b16 %v389, %v388
    %v394 = vpack.c.b16 %v390, %v390
    %vm398 = vcmask 408576
    %v400 = vsel %vm398, %v369, 0
    %vm402 = vcmask 1040384
    %v404 = vsel %vm402, %v394, 0
    %406 = vmatpush.bf16.msra.mxu0 0
    %407 = vmatpush.bf16.msra.mxu0 0
    %408 = vmatpush.bf16.msra.mxu0 0
    %409 = vmatpush.bf16.msra.mxu0 0
    %410 = vmatpush.bf16.msra.mxu0 %v404
    %411 = vmatpush.bf16.msra.mxu0 %v393
    %412 = vmatpush.bf16.msra.mxu0 %v392
    %413 = vmatpush.bf16.msra.mxu0 %v391
    %414 = vmatmul.bf16.gmra.mxu0 %v400
    %v415 = vpop.f32.mrf.mxu0
    %v416 = vadd.f32 0.0, %v415
    %v417 = vpop.f32.mrf.mxu0
    %418 = vdwg.mxu0
    %v426 = vunpack.c.l.b16 %v362
    %v427 = vunpack.c.l.b16 %v363
    %v428 = vunpack.c.l.b16 %v364
    %v429 = vunpack.c.l.b16 %v365
    %v430 = vunpack.c.l.b16 %v366
    %v431 = vunpack.c.l.b16 %v367
    %v432 = vunpack.c.l.b16 %v368
    %v433 = vpack.c.b16 %v427, %v426
    %v434 = vpack.c.b16 %v429, %v428
    %v435 = vpack.c.b16 %v431, %v430
    %v436 = vpack.c.b16 %v432, %v432
    %v441 = vsel %vm398, %v48, 0
    %v444 = vsel %vm402, %v436, 0
    %446 = vmatpush.bf16.msra.mxu0 0
    %447 = vmatpush.bf16.msra.mxu0 0
    %448 = vmatpush.bf16.msra.mxu0 0
    %449 = vmatpush.bf16.msra.mxu0 0
    %450 = vmatpush.bf16.msra.mxu0 %v444
    %451 = vmatpush.bf16.msra.mxu0 %v435
    %452 = vmatpush.bf16.msra.mxu0 %v434
    %453 = vmatpush.bf16.msra.mxu0 %v433
    %454 = vmatmul.bf16.gmra.mxu0 %v441
    %v455 = vpop.f32.mrf.mxu0
    %v456 = vadd.f32 %v416, %v455
    %v457 = vpop.f32.mrf.mxu0
    %458 = vdwg.mxu0
    %v459 = vld [vmem:[%s6] sm:$0x1]
    %v461 = vperm.slane %v459, 0
    %v463 = vadd.f32 %v456, %v461
    %vm464 = vcmask 158720
    %465 = vst.msk [vmem:[#allocation2] sm:$0xf] %vm464, %v463
    // Predicated region
    $region30: #{tpu_custom_call.1} parent=1 // pred_check
      _
    $region31: #{tpu_custom_call.1} parent=1 // pred_check_branch
      %467 = sbr.rel (0) target = $region33
    $region32: #{tpu_custom_call.1} parent=1 // pred_region
      %469 = vsyncadd [#allocation3], 0
      %s471 = sshll.u32 [#allocation2], 4
      %s472 = int_to_ptr.vmem [resolvable:$true] %s471
      %s473 = sshll.u32 %s7, 4
      %s474 = int_to_ptr.hbm [resolvable:$true] %s473
      %476 = dma.vmem_to_hbm [thread:$0]  %s472, 64, %s474, [#allocation3]
    $region33: #{tpu_custom_call.1} parent=1 // pred_fallthru
      _
    // Predicated region
    $region34: #{tpu_custom_call.1} parent=1 // pred_check
      _
    $region35: #{tpu_custom_call.1} parent=1 // pred_check_branch
      %478 = sbr.rel (0) target = $region37
    $region36: #{tpu_custom_call.1} parent=1 // pred_region
      %480 = dma.done [#allocation3], 64
    $region37: #{tpu_custom_call.1} parent=1 // pred_fallthru
      _
    %481 = vsyncpa [#allocation3], 1

</llo_original>
